<compile_context>
chip_gen: v5e
topology: v5e:2x2
jax: 0.10.0
libtpu: 0.0.40
codegen_flags: <defaults>
</compile_context>

<pallas_src>
import functools

import numpy as np
import jax
import jax.numpy as jnp
from jax.experimental import pallas as pl
from jax.experimental.pallas import tpu as pltpu


def _round_up(x, m):
    return (x + m - 1) // m * m


def _pool_pad_matrix(size, k):
    """(size, size) 0/1 matrix M with M[i, j] = 1 iff input index i lies inside
    the stride-1 pooling window that feeds output index j, after the valid
    pooled output (length size-k+1) has been re-centred with replicate padding.
    Fuses valid avg-pool (window sum) + replicate pad along one axis."""
    out_valid = size - k + 1
    pad_lo = (size - out_valid) // 2
    i = np.arange(size)[:, None]
    j = np.arange(size)[None, :]
    start = np.clip(j - pad_lo, 0, out_valid - 1)
    return ((i >= start) & (i < start + k)).astype(np.float32)


def _vmem_config():
    """Per-generation VMEM limit and per-grid-step true-footprint block budget."""
    try:
        cap = int(pltpu.get_tpu_info().vmem_capacity_bytes)
    except Exception:
        cap = 64 * 1024 * 1024                       # conservative v7x-per-TC fallback
    vmem_limit = min(cap * 3 // 4, 100 * 1024 * 1024)  # ~48 MiB v7x, ~96 MiB v5e/v6e
    block_budget = (8 * 1024 * 1024 if cap <= 64 * 1024 * 1024
                    else 16 * 1024 * 1024)           # bigger blocks on 128 MiB parts
    return vmem_limit, block_budget


def _fused_kernel(x_ref, k_ref, o_ref, *, scale):
    # out[bc, H*W] = (x[bc, H*W] @ kron(M_H, M_W)) * 1/(k1*k2)
    # Lane-dense (K = N = H*W) matmul, f32 accumulation, one unmasked full store.
    acc = jnp.dot(x_ref[...], k_ref[...], preferred_element_type=jnp.float32)
    o_ref[...] = (acc * scale).astype(o_ref.dtype)


def _separable_kernel(x_ref, mw_ref, o_ref, *, k1, pad_top, pad_bot, scale):
    tbc, h, w = x_ref.shape
    hout = h - k1 + 1
    # W-direction pooling + replicate pad: one MXU matmul (native dtype in, f32 out).
    y = jnp.dot(x_ref[...].reshape(tbc * h, w), mw_ref[...],
                preferred_element_type=jnp.float32).reshape(tbc, h, w)
    # H-direction pooling: k1 sublane slice-adds.
    v = y[:, 0:hout, :]
    for d in range(1, k1):
        v = v + y[:, d:d + hout, :]
    v = v * scale
    # H-direction replicate pad assembled in registers -> single full-block store.
    parts = []
    if pad_top > 0:
        parts.append(jnp.broadcast_to(v[:, 0:1, :], (tbc, pad_top, w)))
    parts.append(v)
    if pad_bot > 0:
        parts.append(jnp.broadcast_to(v[:, hout - 1:hout, :], (tbc, pad_bot, w)))
    out = parts[0] if len(parts) == 1 else jnp.concatenate(parts, axis=1)
    o_ref[...] = out.astype(o_ref.dtype)


def avgpool2d_forward(x, kernel_size):
    """Pallas forward of AvgPool2d(kernel_size, auto_pad=True, fast_imp=False)."""
    b, c, h, w = x.shape
    k1 = min(h, int(kernel_size[0]))
    k2 = min(w, int(kernel_size[1]))
    scale = 1.0 / float(k1 * k2)
    bc = b * c
    hw = h * w
    itemsize = x.dtype.itemsize

    vmem_limit, block_budget = _vmem_config()
    compiler_params = pltpu.CompilerParams(
        dimension_semantics=("parallel",),
        vmem_limit_bytes=vmem_limit,
    )

    if hw <= 1024:
        # -------- Fused lane-dense path (small spatial extents) --------
        kmat_np = np.kron(_pool_pad_matrix(h, k1), _pool_pad_matrix(w, k2))
        kmat = jnp.asarray(kmat_np, dtype=x.dtype)   # entries are 0/1: exact in bf16

        hw_lanes = _round_up(hw, 128)
        per_row = 4 * hw_lanes * itemsize + hw_lanes * 4   # 2x in + 2x out + f32 acc
        k_bytes = 2 * _round_up(hw, 8) * hw_lanes * itemsize
        rows = max(8, (block_budget - k_bytes) // per_row)
        rows = (rows // 8) * 8                              # sublane-aligned block rows
        tbc = bc if bc <= rows else rows
        grid = (pl.cdiv(bc, tbc),)                          # partial tail block masked

        out2 = pl.pallas_call(
            functools.partial(_fused_kernel, scale=scale),
            out_shape=jax.ShapeDtypeStruct((bc, hw), x.dtype),
            grid_spec=pltpu.PrefetchScalarGridSpec(
                num_scalar_prefetch=0,
                grid=grid,
                in_specs=[
                    pl.BlockSpec((tbc, hw), lambda i: (i, 0)),
                    pl.BlockSpec((hw, hw), lambda i: (0, 0)),   # resident pooling matrix
                ],
                out_specs=pl.BlockSpec((tbc, hw), lambda i: (i, 0)),
            ),
            compiler_params=compiler_params,
        )(x.reshape(bc, hw), kmat)
        return out2.reshape(b, c, h, w)

    # -------- Separable fallback (larger spatial extents) --------
    hout = h - k1 + 1
    pad_top = (h - hout) // 2
    pad_bot = (h - hout + 1) // 2
    mw = jnp.asarray(_pool_pad_matrix(w, k2), dtype=x.dtype)   # 0/1 entries

    w_lanes = _round_up(w, 128)
    per_row = h * w_lanes * (4 * itemsize + 12)   # 2x in + 2x out + y/v/concat f32 temps
    mw_bytes = 2 * _round_up(w, 8) * w_lanes * itemsize
    rows = max(1, (block_budget - mw_bytes) // per_row)
    tbc = min(bc, rows)
    grid = (pl.cdiv(bc, tbc),)

    out3 = pl.pallas_call(
        functools.partial(_separable_kernel, k1=k1, pad_top=pad_top,
                          pad_bot=pad_bot, scale=scale),
        out_shape=jax.ShapeDtypeStruct((bc, h, w), x.dtype),
        grid_spec=pltpu.PrefetchScalarGridSpec(
            num_scalar_prefetch=0,
            grid=grid,
            in_specs=[
                pl.BlockSpec((tbc, h, w), lambda i: (i, 0, 0)),
                pl.BlockSpec((w, w), lambda i: (0, 0)),
            ],
            out_specs=pl.BlockSpec((tbc, h, w), lambda i: (i, 0, 0)),
        ),
        compiler_params=compiler_params,
    )(x.reshape(bc, h, w), mw)
    return out3.reshape(b, c, h, w)


def avgpool2d_reference(x, kernel_size):
    """Pure-JAX mirror of the PyTorch forward (fast_imp=False, auto_pad=True)."""
    n, c, h, w = x.shape
    k1 = min(h, int(kernel_size[0]))
    k2 = min(w, int(kernel_size[1]))
    s = jnp.cumsum(jnp.cumsum(x, axis=-1), axis=-2)
    s = jnp.pad(s, ((0, 0), (0, 0), (1, 0), (1, 0)))
    s1 = s[:, :, :-k1, :-k2]
    s2 = s[:, :, :-k1, k2:]
    s3 = s[:, :, k1:, :-k2]
    s4 = s[:, :, k1:, k2:]
    out = (s4 + s1 - s2 - s3) / (k1 * k2)
    _h, _w = out.shape[2:]
    pad = ((0, 0), (0, 0),
           ((h - _h) // 2, (h - _h + 1) // 2),
           ((w - _w) // 2, (w - _w + 1) // 2))
    return jnp.pad(out, pad, mode='edge')


if __name__ == "__main__":
    # Small shapes consistent with the module: B=2, C=4, H=W=16, 5x5 window.
    B, C, H, W = 2, 4, 16, 16
    kernel_size = (5, 5)

    key = jax.random.PRNGKey(0)
    x = jax.random.normal(key, (B, C, H, W), dtype=jnp.float32)

    out = avgpool2d_forward(x, kernel_size)
    out = jax.block_until_ready(out)

    ref = avgpool2d_reference(x, kernel_size)
    assert out.shape == (B, C, H, W)
    assert jnp.allclose(out, ref, atol=1e-4, rtol=1e-4), "mismatch vs reference"

    print("KERNEL_OK")
</pallas_src>

<mosaic_0001>
module attributes {stable_mosaic.version = 11 : i64} {
  func.func @_fused_kernel(%arg0: i32, %arg1: memref<8x256xf32, #tpu.memory_space<vmem>>, %arg2: memref<256x256xf32, #tpu.memory_space<vmem>>, %arg3: memref<8x256xf32, #tpu.memory_space<vmem>>) attributes {dimension_semantics = [#tpu.dimension_semantics<parallel>], iteration_bounds = array<i64: 1>, scalar_prefetch = 0 : i64, scratch_operands = 0 : i64, tpu.core_type = #tpu.core_type<tc>, window_params = [{transform_indices = @transform_0, window_bounds = array<i64: 8, 256>}, {pipeline_mode = #tpu.pipeline_mode<synchronous>, transform_indices = @transform_1, window_bounds = array<i64: 256, 256>}, {transform_indices = @transform_2, window_bounds = array<i64: 8, 256>}]} {
    %c0 = arith.constant 0 : index
    %c0_0 = arith.constant 0 : index
    %0 = vector.load %arg1[%c0, %c0_0] : memref<8x256xf32, #tpu.memory_space<vmem>>, vector<8x256xf32>
    %c0_1 = arith.constant 0 : index
    %c0_2 = arith.constant 0 : index
    %1 = vector.load %arg2[%c0_1, %c0_2] : memref<256x256xf32, #tpu.memory_space<vmem>>, vector<256x256xf32>
    %cst = arith.constant dense<0.000000e+00> : vector<8x256xf32>
    %2 = tpu.matmul %0, %1, %cst {dimension_numbers = #tpu.dot_dimension_numbers<[1], [0], [0], [1], [0, 0, 1, 1], [], []>} : vector<8x256xf32>, vector<256x256xf32>, vector<8x256xf32> -> vector<8x256xf32>
    %cst_3 = arith.constant 4.000000e-02 : f32
    %3 = vector.broadcast %cst_3 : f32 to vector<8x256xf32>
    %4 = arith.mulf %2, %3 : vector<8x256xf32>
    %c0_4 = arith.constant 0 : index
    %c0_5 = arith.constant 0 : index
    %5 = vector.load %arg3[%c0_4, %c0_5] : memref<8x256xf32, #tpu.memory_space<vmem>>, vector<8x256xf32>
    tpu.vector_store %arg3[%c0_4, %c0_5], %4 {strides = array<i32>} : memref<8x256xf32, #tpu.memory_space<vmem>>, vector<8x256xf32>,
    return
  }
  func.func @transform_0(%arg0: i32) -> (i32, i32) {
    %c0_i32 = arith.constant 0 : i32
    %c0_i32_0 = arith.constant 0 : i32
    return %arg0, %c0_i32 : i32, i32
  }
  func.func @transform_1(%arg0: i32) -> (i32, i32) {
    %c0_i32 = arith.constant 0 : i32
    %c0_i32_0 = arith.constant 0 : i32
    %c0_i32_1 = arith.constant 0 : i32
    return %c0_i32, %c0_i32_0 : i32, i32
  }
  func.func @transform_2(%arg0: i32) -> (i32, i32) {
    %c0_i32 = arith.constant 0 : i32
    %c0_i32_0 = arith.constant 0 : i32
    return %arg0, %c0_i32 : i32, i32
  }
}

</mosaic_0001>

<llo_original>
// kernel: tpu_custom_call.1
$region0: #{tpu_custom_call.1}
  #allocation0 [shape = 'u32[]', space=smem, size = 0x4, offset = 0x4, fixed_abs, tag = 'smem constant byte address 0x4 - core index']
  #allocation1 [shape = 'u32[72,128]{1,0:T(1,128)}', space=vmem, size = 0x9000, scoped, tag = 'internal scratch']
  %s0 = inlined_call_operand.hbm [shape: f32[8,256], index: 0, kind: input, shape index: {}]
  %s1 = inlined_call_operand.hbm [shape: f32[256,256], index: 1, kind: input, shape index: {}]
  %s2 = inlined_call_operand.hbm [shape: f32[8,256], index: 2, kind: output, shape index: {}]
  %s3 = sld [smem:[#allocation0]]
  $region26: #{tpu_custom_call.1} parent=0
    _
  %s5 = ssub.s32 1, %s3
  %s6 = scalar_select 0, %s5, %s3
  $region1: #{tpu_custom_call.1} parent=0
    #allocation2 [shape = 'u8[8192]{0}', space=vmem, size = 0x2000, scoped, tag = 'input window, operand 0, single buffered']
    #allocation3 [shape = 's32[1]{0}', space=sflag, size = 0x4, scoped, tag = 'scoped memory for tpu_custom_call.1']
    #allocation4 [shape = 's32[1]{0}', space=sflag, size = 0x4, scoped, tag = 'scoped memory for tpu_custom_call.1']
    #allocation5 [shape = 'u8[262144]{0}', space=vmem, size = 0x40000, scoped, tag = 'input window, operand 1, single buffered']
    #allocation6 [shape = 's32[1]{0}', space=sflag, size = 0x4, scoped, tag = 'scoped memory for tpu_custom_call.1']
    #allocation7 [shape = 'u8[8192]{0}', space=vmem, size = 0x2000, scoped, tag = 'output window, operand 0, single buffered']
    %7 = vsyncpa [#allocation3], 0
    %8 = vsyncpa [#allocation6], 0
    %9 = vsyncpa [#allocation4], 0
    // Predicated region
    $region2: #{tpu_custom_call.1} parent=1 // pred_check
      _
    $region3: #{tpu_custom_call.1} parent=1 // pred_check_branch
      %11 = sbr.rel (0) target = $region5
    $region4: #{tpu_custom_call.1} parent=1 // pred_region
      %13 = vsyncadd [#allocation3], 0
      %s15 = sshll.u32 %s0, 4
      %s16 = int_to_ptr.hbm [resolvable:$true] %s15
      %s17 = sshll.u32 [#allocation2], 4
      %s18 = int_to_ptr.vmem [resolvable:$true] %s17
      %20 = dma.hbm_to_vmem [thread:$0]  %s16, 256, %s18, [#allocation3]
    $region5: #{tpu_custom_call.1} parent=1 // pred_fallthru
      _
    // Predicated region
    $region6: #{tpu_custom_call.1} parent=1 // pred_check
      _
    $region7: #{tpu_custom_call.1} parent=1 // pred_check_branch
      %22 = sbr.rel (0) target = $region9
    $region8: #{tpu_custom_call.1} parent=1 // pred_region
      %24 = vsyncadd [#allocation6], 0
      %s25 = sshll.u32 %s1, 4
      %s26 = int_to_ptr.hbm [resolvable:$true] %s25
      %s27 = sshll.u32 [#allocation5], 4
      %s28 = int_to_ptr.vmem [resolvable:$true] %s27
      %33 = dma.hbm_to_vmem [thread:$0]  %s26, 8192, %s28, [#allocation6], 256, 256, 16
    $region9: #{tpu_custom_call.1} parent=1 // pred_fallthru
      _
    // Predicated region
    $region10: #{tpu_custom_call.1} parent=1 // pred_check
      _
    $region11: #{tpu_custom_call.1} parent=1 // pred_check_branch
      %35 = sbr.rel (0) target = $region13
    $region12: #{tpu_custom_call.1} parent=1 // pred_region
      %37 = dma.done [#allocation3], 256
    $region13: #{tpu_custom_call.1} parent=1 // pred_fallthru
      _
    // Predicated region
    $region14: #{tpu_custom_call.1} parent=1 // pred_check
      _
    $region15: #{tpu_custom_call.1} parent=1 // pred_check_branch
      %39 = sbr.rel (0) target = $region17
    $region16: #{tpu_custom_call.1} parent=1 // pred_region
      %41 = dma.done [#allocation6], 8192
    $region17: #{tpu_custom_call.1} parent=1 // pred_fallthru
      _
    %v42 = vld [vmem:[#allocation2] sm:$0xff]
    %v43 = vld [vmem:[#allocation2 + $0x8] sm:$0xff]
    %v44 = vld [vmem:[#allocation5] sm:$0xff]
    %v45 = vld [vmem:[#allocation5 + $0x8] sm:$0xff]
    %v46 = vld [vmem:[#allocation5 + $0x10] sm:$0xff]
    %v47 = vld [vmem:[#allocation5 + $0x18] sm:$0xff]
    %v48 = vld [vmem:[#allocation5 + $0x20] sm:$0xff]
    %v49 = vld [vmem:[#allocation5 + $0x28] sm:$0xff]
    %v50 = vld [vmem:[#allocation5 + $0x30] sm:$0xff]
    %v51 = vld [vmem:[#allocation5 + $0x38] sm:$0xff]
    %v52 = vld [vmem:[#allocation5 + $0x40] sm:$0xff]
    %v53 = vld [vmem:[#allocation5 + $0x48] sm:$0xff]
    %v54 = vld [vmem:[#allocation5 + $0x50] sm:$0xff]
    %v55 = vld [vmem:[#allocation5 + $0x58] sm:$0xff]
    %v56 = vld [vmem:[#allocation5 + $0x60] sm:$0xff]
    %v57 = vld [vmem:[#allocation5 + $0x68] sm:$0xff]
    %v58 = vld [vmem:[#allocation5 + $0x70] sm:$0xff]
    %v59 = vld [vmem:[#allocation5 + $0x78] sm:$0xff]
    %v60 = vld [vmem:[#allocation5 + $0x80] sm:$0xff]
    %v61 = vld [vmem:[#allocation5 + $0x88] sm:$0xff]
    %v62 = vld [vmem:[#allocation5 + $0x90] sm:$0xff]
    %v63 = vld [vmem:[#allocation5 + $0x98] sm:$0xff]
    %v64 = vld [vmem:[#allocation5 + $0xa0] sm:$0xff]
    %v65 = vld [vmem:[#allocation5 + $0xa8] sm:$0xff]
    %v66 = vld [vmem:[#allocation5 + $0xb0] sm:$0xff]
    %v67 = vld [vmem:[#allocation5 + $0xb8] sm:$0xff]
    %v68 = vld [vmem:[#allocation5 + $0xc0] sm:$0xff]
    %v69 = vld [vmem:[#allocation5 + $0xc8] sm:$0xff]
    %v70 = vld [vmem:[#allocation5 + $0xd0] sm:$0xff]
    %v71 = vld [vmem:[#allocation5 + $0xd8] sm:$0xff]
    %v72 = vld [vmem:[#allocation5 + $0xe0] sm:$0xff]
    %v73 = vld [vmem:[#allocation5 + $0xe8] sm:$0xff]
    %v74 = vld [vmem:[#allocation5 + $0xf0] sm:$0xff]
    %v75 = vld [vmem:[#allocation5 + $0xf8] sm:$0xff]
    %v76 = vld [vmem:[#allocation5 + $0x100] sm:$0xff]
    %v77 = vld [vmem:[#allocation5 + $0x108] sm:$0xff]
    %v78 = vld [vmem:[#allocation5 + $0x110] sm:$0xff]
    %v79 = vld [vmem:[#allocation5 + $0x118] sm:$0xff]
    %v80 = vld [vmem:[#allocation5 + $0x120] sm:$0xff]
    %v81 = vld [vmem:[#allocation5 + $0x128] sm:$0xff]
    %v82 = vld [vmem:[#allocation5 + $0x130] sm:$0xff]
    %v83 = vld [vmem:[#allocation5 + $0x138] sm:$0xff]
    %v84 = vld [vmem:[#allocation5 + $0x140] sm:$0xff]
    %v85 = vld [vmem:[#allocation5 + $0x148] sm:$0xff]
    %v86 = vld [vmem:[#allocation5 + $0x150] sm:$0xff]
    %v87 = vld [vmem:[#allocation5 + $0x158] sm:$0xff]
    %v88 = vld [vmem:[#allocation5 + $0x160] sm:$0xff]
    %v89 = vld [vmem:[#allocation5 + $0x168] sm:$0xff]
    %v90 = vld [vmem:[#allocation5 + $0x170] sm:$0xff]
    %v91 = vld [vmem:[#allocation5 + $0x178] sm:$0xff]
    %v92 = vld [vmem:[#allocation5 + $0x180] sm:$0xff]
    %v93 = vld [vmem:[#allocation5 + $0x188] sm:$0xff]
    %v94 = vld [vmem:[#allocation5 + $0x190] sm:$0xff]
    %v95 = vld [vmem:[#allocation5 + $0x198] sm:$0xff]
    %v96 = vld [vmem:[#allocation5 + $0x1a0] sm:$0xff]
    %v97 = vld [vmem:[#allocation5 + $0x1a8] sm:$0xff]
    %v98 = vld [vmem:[#allocation5 + $0x1b0] sm:$0xff]
    %v99 = vld [vmem:[#allocation5 + $0x1b8] sm:$0xff]
    %v100 = vld [vmem:[#allocation5 + $0x1c0] sm:$0xff]
    %v101 = vld [vmem:[#allocation5 + $0x1c8] sm:$0xff]
    %v102 = vld [vmem:[#allocation5 + $0x1d0] sm:$0xff]
    %v103 = vld [vmem:[#allocation5 + $0x1d8] sm:$0xff]
    %v104 = vld [vmem:[#allocation5 + $0x1e0] sm:$0xff]
    %v105 = vld [vmem:[#allocation5 + $0x1e8] sm:$0xff]
    %v106 = vld [vmem:[#allocation5 + $0x1f0] sm:$0xff]
    %v107 = vld [vmem:[#allocation5 + $0x1f8] sm:$0xff]
    %108 = vmatpush.msra.mxu0 %v74
    %109 = vmatpush.msra.mxu0 %v72
    %110 = vmatpush.msra.mxu0 %v70
    %111 = vmatpush.msra.mxu0 %v68
    %112 = vmatpush.msra.mxu0 %v66
    %113 = vmatpush.msra.mxu0 %v64
    %114 = vmatpush.msra.mxu0 %v62
    %115 = vmatpush.msra.mxu0 %v60
    %116 = vmatpush.msra.mxu0 %v58
    %117 = vmatpush.msra.mxu0 %v56
    %118 = vmatpush.msra.mxu0 %v54
    %119 = vmatpush.msra.mxu0 %v52
    %120 = vmatpush.msra.mxu0 %v50
    %121 = vmatpush.msra.mxu0 %v48
    %122 = vmatpush.msra.mxu0 %v46
    %123 = vmatpush.msra.mxu0 %v44
    %124 = vmatmul.f32.gmra.mxu0 %v42
    %v125 = vpop.f32.mrf.mxu0
    %v126 = vadd.f32 0.0, %v125
    %127 = vdwg.mxu0
    %128 = vmatpush.msra.mxu0 %v106
    %129 = vmatpush.msra.mxu0 %v104
    %130 = vmatpush.msra.mxu0 %v102
    %131 = vmatpush.msra.mxu0 %v100
    %132 = vmatpush.msra.mxu0 %v98
    %133 = vmatpush.msra.mxu0 %v96
    %134 = vmatpush.msra.mxu0 %v94
    %135 = vmatpush.msra.mxu0 %v92
    %136 = vmatpush.msra.mxu0 %v90
    %137 = vmatpush.msra.mxu0 %v88
    %138 = vmatpush.msra.mxu0 %v86
    %139 = vmatpush.msra.mxu0 %v84
    %140 = vmatpush.msra.mxu0 %v82
    %141 = vmatpush.msra.mxu0 %v80
    %142 = vmatpush.msra.mxu0 %v78
    %143 = vmatpush.msra.mxu0 %v76
    %144 = vmatmul.f32.gmra.mxu0 %v43
    %v145 = vpop.f32.mrf.mxu0
    %v146 = vadd.f32 %v126, %v145
    %147 = vdwg.mxu0
    %148 = vmatpush.msra.mxu0 %v75
    %149 = vmatpush.msra.mxu0 %v73
    %150 = vmatpush.msra.mxu0 %v71
    %151 = vmatpush.msra.mxu0 %v69
    %152 = vmatpush.msra.mxu0 %v67
    %153 = vmatpush.msra.mxu0 %v65
    %154 = vmatpush.msra.mxu0 %v63
    %155 = vmatpush.msra.mxu0 %v61
    %156 = vmatpush.msra.mxu0 %v59
    %157 = vmatpush.msra.mxu0 %v57
    %158 = vmatpush.msra.mxu0 %v55
    %159 = vmatpush.msra.mxu0 %v53
    %160 = vmatpush.msra.mxu0 %v51
    %161 = vmatpush.msra.mxu0 %v49
    %162 = vmatpush.msra.mxu0 %v47
    %163 = vmatpush.msra.mxu0 %v45
    %164 = vmatmul.f32.gmra.mxu0 %v42
    %v165 = vpop.f32.mrf.mxu0
    %v166 = vadd.f32 0.0, %v165
    %167 = vdwg.mxu0
    %168 = vmatpush.msra.mxu0 %v107
    %169 = vmatpush.msra.mxu0 %v105
    %170 = vmatpush.msra.mxu0 %v103
    %171 = vmatpush.msra.mxu0 %v101
    %172 = vmatpush.msra.mxu0 %v99
    %173 = vmatpush.msra.mxu0 %v97
    %174 = vmatpush.msra.mxu0 %v95
    %175 = vmatpush.msra.mxu0 %v93
    %176 = vmatpush.msra.mxu0 %v91
    %177 = vmatpush.msra.mxu0 %v89
    %178 = vmatpush.msra.mxu0 %v87
    %179 = vmatpush.msra.mxu0 %v85
    %180 = vmatpush.msra.mxu0 %v83
    %181 = vmatpush.msra.mxu0 %v81
    %182 = vmatpush.msra.mxu0 %v79
    %183 = vmatpush.msra.mxu0 %v77
    %184 = vmatmul.f32.gmra.mxu0 %v43
    %v185 = vpop.f32.mrf.mxu0
    %v186 = vadd.f32 %v166, %v185
    %187 = vdwg.mxu0
    %v188 = vmul.f32 %v146, 0.04
    %v189 = vmul.f32 %v186, 0.04
    %190 = vst [vmem:[#allocation7] sm:$0xff] %v188
    %191 = vst [vmem:[#allocation7 + $0x8] sm:$0xff] %v189
    // Predicated region
    $region18: #{tpu_custom_call.1} parent=1 // pred_check
      _
    $region19: #{tpu_custom_call.1} parent=1 // pred_check_branch
      %193 = sbr.rel (0) target = $region21
    $region20: #{tpu_custom_call.1} parent=1 // pred_region
      %195 = vsyncadd [#allocation4], 0
      %s197 = sshll.u32 [#allocation7], 4
      %s198 = int_to_ptr.vmem [resolvable:$true] %s197
      %s199 = sshll.u32 %s2, 4
      %s200 = int_to_ptr.hbm [resolvable:$true] %s199
      %202 = dma.vmem_to_hbm [thread:$0]  %s198, 256, %s200, [#allocation4]
    $region21: #{tpu_custom_call.1} parent=1 // pred_fallthru
      _
    // Predicated region
    $region22: #{tpu_custom_call.1} parent=1 // pred_check
      _
    $region23: #{tpu_custom_call.1} parent=1 // pred_check_branch
      %204 = sbr.rel (0) target = $region25
    $region24: #{tpu_custom_call.1} parent=1 // pred_region
      %206 = dma.done [#allocation4], 256
    $region25: #{tpu_custom_call.1} parent=1 // pred_fallthru
      _
    %207 = vsyncpa [#allocation3], 1
    %208 = vsyncpa [#allocation6], 1
    %209 = vsyncpa [#allocation4], 1

</llo_original>
